<compile_context>
chip_gen: v7x
topology: tpu7x:2x2x1
jax: 0.10.0
libtpu: 0.0.40
codegen_flags: <defaults>
</compile_context>

<pallas_src>
import functools

import jax
import jax.numpy as jnp
from jax.experimental import pallas as pl
from jax.experimental.pallas import tpu as pltpu


def _round_up(v, m):
    return -(-v // m) * m


def _vmem_capacity_bytes():
    """Per-core VMEM capacity; conservative v7x value if the query fails."""
    try:
        cap = getattr(pltpu.get_tpu_info(), "vmem_capacity_bytes", None)
        if cap:
            return int(cap)
    except Exception:
        pass
    return 64 << 20


def _footprint_bytes(b_tile, l_tile, c_in, c_out, k, itemsize, w_itemsize):
    """VMEM estimate: double-buffered pipeline blocks + in-kernel temporaries."""
    ci8 = _round_up(c_in, 8)
    co8 = _round_up(c_out, 8)
    kc8 = _round_up(max(k * c_in, 1), 8)
    kc128 = _round_up(max(k * c_in, 1), 128)
    halo_blk = _round_up(max(k - 1, 1), 128)
    tl128 = _round_up(l_tile, 128)

    x_blk = b_tile * ci8 * tl128 * itemsize
    o_blk = b_tile * co8 * tl128 * itemsize
    halo_bl = b_tile * ci8 * halo_blk * itemsize
    w_blk = co8 * kc128 * w_itemsize
    b_blk = co8 * 128 * 4
    pipe = 2 * (x_blk + o_blk + halo_bl + w_blk + b_blk)     # double-buffered

    # In-kernel temporaries: x_full, per-element K-tap stacks + lane-concat RHS,
    # f32 accumulator, cast copy of the output block.
    x_full = b_tile * ci8 * _round_up(l_tile + max(k - 1, 0), 128) * itemsize
    stack = 2 * b_tile * kc8 * tl128 * itemsize
    acc = b_tile * co8 * tl128 * 4
    return pipe + x_full + stack + acc + o_blk + (2 << 20)


def _plan_tiles(n, c_in, c_out, k, length, itemsize, w_itemsize, budget, l_tile=None):
    """Pick (b_tile, l_tile): max L tile fitting VMEM, then fold batch until each
    grid step moves >= ~1 MiB of HBM (amortizes fixed per-step pipeline cost)."""
    halo_blk = _round_up(max(k - 1, 1), 128)

    def fits(bt, tl):
        return _footprint_bytes(bt, tl, c_in, c_out, k, itemsize, w_itemsize) <= budget

    if l_tile is None:
        if fits(1, length):
            l_tile = length
        else:
            lo, hi = 1, max(length // halo_blk, 1)
            while lo < hi:                       # binary search, multiples of halo_blk
                mid = (lo + hi + 1) // 2
                if fits(1, mid * halo_blk):
                    lo = mid
                else:
                    hi = mid - 1
            l_tile = lo * halo_blk
    l_tile = min(l_tile, length)

    target_step_bytes = 1 << 20
    b_tile = 1
    for cand in range(1, n + 1):
        if n % cand:
            continue
        if not fits(cand, l_tile):
            break
        b_tile = cand
        if cand * (c_in + c_out) * l_tile * itemsize >= target_step_bytes:
            break
    return b_tile, l_tile


def _causal_conv1d_kernel(*refs, b_tile, l_tile, kernel_size, has_halo, halo_blk):
    # refs (has_halo):     x(bt,Cin,TL), halo(bt,Cin,HALO), w(Cout,K*Cin), b(Cout,1), o(bt,Cout,TL)
    # refs (not has_halo): x, w, b, o
    if has_halo:
        x_ref, halo_ref, w_ref, b_ref, o_ref = refs
    else:
        x_ref, w_ref, b_ref, o_ref = refs
        halo_ref = None
    halo_w = kernel_size - 1

    cols = []
    for b in range(b_tile):
        x_cur = x_ref[b]                                        # (C_in, TL)
        if halo_w == 0:
            x_stack = x_cur
        else:
            if has_halo:
                tail = halo_ref[b][:, halo_blk - halo_w:]       # prev tile's last K-1 cols
                halo = jnp.where(pl.program_id(1) == 0,
                                 jnp.zeros_like(tail), tail)    # causal zeros on tile 0
            else:
                halo = jnp.zeros((x_cur.shape[0], halo_w), x_cur.dtype)
            x_full = jnp.concatenate([halo, x_cur], axis=-1)    # (C_in, TL+K-1)
            # All K taps stacked so the whole conv is one MXU matmul (contraction K*C_in).
            x_stack = jnp.concatenate(
                [x_full[:, t:t + l_tile] for t in range(kernel_size)], axis=0)
        cols.append(x_stack)

    # Lane-concat the folded batch elements -> a single wide matmul fills lanes.
    rhs = cols[0] if b_tile == 1 else jnp.concatenate(cols, axis=-1)   # (K*C_in, bt*TL)
    acc = jnp.dot(w_ref[...], rhs, preferred_element_type=jnp.float32)
    acc = acc + b_ref[...]
    for b in range(b_tile):
        o_ref[b] = acc[:, b * l_tile:(b + 1) * l_tile].astype(o_ref.dtype)


def causal_conv1d(x, weight, bias, *, l_tile=None, b_tile=None, compute_dtype=None):
    """x: (N, C_in, L); weight: (C_out, C_in, K); bias: (C_out,). Returns (N, C_out, L)."""
    if compute_dtype is not None:
        x = x.astype(compute_dtype)
        weight = weight.astype(compute_dtype)

    n, c_in, length = x.shape
    c_out, c_in_w, k = weight.shape
    assert c_in_w == c_in

    itemsize = jnp.dtype(x.dtype).itemsize
    w_itemsize = jnp.dtype(weight.dtype).itemsize

    cap = _vmem_capacity_bytes()
    budget = int(cap * 0.6)                       # generation-aware working-set budget
    auto_bt, auto_tl = _plan_tiles(n, c_in, c_out, k, length, itemsize, w_itemsize,
                                   budget, l_tile=l_tile)
    if l_tile is None:
        l_tile = auto_tl
    l_tile = min(l_tile, length)
    if b_tile is None:
        b_tile = auto_bt
    assert n % b_tile == 0, "b_tile must divide the batch size"

    halo_blk = _round_up(max(k - 1, 1), 128)
    multi_tile = l_tile < length
    if multi_tile:
        assert l_tile % halo_blk == 0, "l_tile must be a multiple of 128 (halo block)"
        length_p = _round_up(length, l_tile)
        if length_p != length:
            # Right-pad: causal conv => padded tail never affects valid outputs.
            x = jnp.pad(x, ((0, 0), (0, 0), (0, length_p - length)))
    else:
        length_p = length
    num_l_tiles = length_p // l_tile
    num_b_blocks = n // b_tile
    has_halo = multi_tile and k > 1

    # Fused tap weight: (C_out, K*C_in) with [o, t*C_in + c] == weight[o, c, t].
    w2d = jnp.transpose(weight, (0, 2, 1)).reshape(c_out, k * c_in)
    b2d = bias.astype(jnp.float32).reshape(c_out, 1)

    footprint = _footprint_bytes(b_tile, l_tile, c_in, c_out, k, itemsize, w_itemsize)
    vmem_limit = int(min(max(int(footprint * 1.25), 16 << 20), int(cap * 0.75)))

    kernel = functools.partial(
        _causal_conv1d_kernel, b_tile=b_tile, l_tile=l_tile, kernel_size=k,
        has_halo=has_halo, halo_blk=halo_blk)

    in_specs = [pl.BlockSpec((b_tile, c_in, l_tile), lambda b, j: (b, 0, j))]
    args = [x]
    if has_halo:
        r = l_tile // halo_blk
        # Tiny overlapping re-read of the previous tile's tail (read-only, so the
        # L axis stays fully parallel). Tile 0 maps to block 0 and is zeroed in-kernel.
        in_specs.append(pl.BlockSpec(
            (b_tile, c_in, halo_blk),
            lambda b, j: (b, 0, jnp.maximum(j * r - 1, 0))))
        args.append(x)
    in_specs += [
        pl.BlockSpec((c_out, k * c_in), lambda b, j: (0, 0)),   # grid-invariant weight
        pl.BlockSpec((c_out, 1), lambda b, j: (0, 0)),          # grid-invariant bias
    ]
    args += [w2d, b2d]

    out = pl.pallas_call(
        kernel,
        out_shape=jax.ShapeDtypeStruct((n, c_out, length_p), x.dtype),
        grid=(num_b_blocks, num_l_tiles),
        in_specs=in_specs,
        out_specs=pl.BlockSpec((b_tile, c_out, l_tile), lambda b, j: (b, 0, j)),
        compiler_params=pltpu.CompilerParams(
            # No carry between L tiles anymore -> both axes are independent and
            # can be sharded across TensorCores (important for v7x, small N).
            dimension_semantics=("parallel", "parallel"),
            vmem_limit_bytes=vmem_limit,
        ),
    )(*args)

    if length_p != length:
        out = out[:, :, :length]
    return out


class Conv1DPaddedPallas:
    """JAX/Pallas port of Conv1DPadded (causal 1D conv + dropout-in-eval)."""

    def __init__(self, in_channels, out_channels, kernel_size, dropout_probability, key):
        self.kernel_size = kernel_size
        self.padding = kernel_size - 1
        self.dropout_probability = dropout_probability  # identity in eval mode
        kw, kb = jax.random.split(key)
        # torch.nn.Conv1d default init: U(-sqrt(k), sqrt(k)), k = 1/(C_in*K)
        bound = 1.0 / (in_channels * kernel_size) ** 0.5
        self.weight = jax.random.uniform(
            kw, (out_channels, in_channels, kernel_size),
            minval=-bound, maxval=bound, dtype=jnp.float32)
        self.bias = jax.random.uniform(
            kb, (out_channels,), minval=-bound, maxval=bound, dtype=jnp.float32)

    def __call__(self, x):
        y = causal_conv1d(x, self.weight, self.bias)
        # TODO(synk): training-mode dropout not implemented; eval mode = identity.
        return y


def _reference(x, weight, bias, pad):
    x_pad = jnp.pad(x, ((0, 0), (0, 0), (pad, 0)))
    out = jax.lax.conv_general_dilated(
        x_pad, weight, window_strides=(1,), padding="VALID",
        dimension_numbers=("NCH", "OIH", "NCH"))
    return out + bias[None, :, None]


if __name__ == "__main__":
    key = jax.random.PRNGKey(0)
    k_x, k_params, k_x2, k_w1, k_b1 = jax.random.split(key, 5)

    # Small config consistent with the module (single L tile, batch-folded path).
    N, C_IN, C_OUT, L, K = 2, 4, 8, 16, 3
    x = jax.random.normal(k_x, (N, C_IN, L), dtype=jnp.float32)
    module = Conv1DPaddedPallas(C_IN, C_OUT, K, dropout_probability=0.1, key=k_params)

    y = jax.block_until_ready(module(x))
    y_ref = _reference(x, module.weight, module.bias, module.padding)
    assert y.shape == (N, C_OUT, L)
    assert jnp.allclose(y, y_ref, atol=1e-5, rtol=1e-5)

    # Exercise the multi-L-tile path (overlapping-read causal halo across tiles).
    L2 = 512
    x2 = jax.random.normal(k_x2, (N, C_IN, L2), dtype=jnp.float32)
    y2 = jax.block_until_ready(
        causal_conv1d(x2, module.weight, module.bias, l_tile=128))
    y2_ref = _reference(x2, module.weight, module.bias, module.padding)
    assert y2.shape == (N, C_OUT, L2)
    assert jnp.allclose(y2, y2_ref, atol=1e-5, rtol=1e-5)

    # K == 1 path (no halo, no tap stacking).
    w1 = jax.random.normal(k_w1, (C_OUT, C_IN, 1), dtype=jnp.float32) * 0.1
    b1 = jax.random.normal(k_b1, (C_OUT,), dtype=jnp.float32) * 0.1
    y3 = jax.block_until_ready(causal_conv1d(x, w1, b1))
    y3_ref = _reference(x, w1, b1, 0)
    assert jnp.allclose(y3, y3_ref, atol=1e-5, rtol=1e-5)

    print("KERNEL_OK")
</pallas_src>

<mosaic_0001>
module attributes {stable_mosaic.version = 11 : i64} {
  func.func @_causal_conv1d_kernel(%arg0: i32, %arg1: i32, %arg2: memref<2x4x16xf32, #tpu.memory_space<vmem>>, %arg3: memref<8x12xf32, #tpu.memory_space<vmem>>, %arg4: memref<8x1xf32, #tpu.memory_space<vmem>>, %arg5: memref<2x8x16xf32, #tpu.memory_space<vmem>>) attributes {dimension_semantics = [#tpu.dimension_semantics<parallel>, #tpu.dimension_semantics<parallel>], iteration_bounds = array<i64: 1, 1>, scalar_prefetch = 0 : i64, scratch_operands = 0 : i64, tpu.core_type = #tpu.core_type<tc>, window_params = [{transform_indices = @transform_0, window_bounds = array<i64: 2, 4, 16>}, {pipeline_mode = #tpu.pipeline_mode<synchronous>, transform_indices = @transform_1, window_bounds = array<i64: 8, 12>}, {pipeline_mode = #tpu.pipeline_mode<synchronous>, transform_indices = @transform_2, window_bounds = array<i64: 8, 1>}, {transform_indices = @transform_3, window_bounds = array<i64: 2, 8, 16>}]} {
    %c0 = arith.constant 0 : index
    %c0_0 = arith.constant 0 : index
    %c0_1 = arith.constant 0 : index
    %0 = vector.load %arg2[%c0, %c0_0, %c0_1] : memref<2x4x16xf32, #tpu.memory_space<vmem>>, vector<1x4x16xf32>
    %1 = vector.shape_cast %0 : vector<1x4x16xf32> to vector<4x16xf32>
    %cst = arith.constant 0.000000e+00 : f32
    %2 = vector.broadcast %cst : f32 to vector<4x2xf32>
    %3 = tpu.concatenate %2, %1 in 1 : vector<4x2xf32>, vector<4x16xf32> -> vector<4x18xf32>
    %4 = vector.extract_strided_slice %3 {offsets = [0, 0], sizes = [4, 16], strides = [1, 1]} : vector<4x18xf32> to vector<4x16xf32>
    %5 = vector.extract_strided_slice %3 {offsets = [0, 1], sizes = [4, 16], strides = [1, 1]} : vector<4x18xf32> to vector<4x16xf32>
    %6 = vector.extract_strided_slice %3 {offsets = [0, 2], sizes = [4, 16], strides = [1, 1]} : vector<4x18xf32> to vector<4x16xf32>
    %7 = tpu.concatenate %4, %5, %6 in 0 : vector<4x16xf32>, vector<4x16xf32>, vector<4x16xf32> -> vector<12x16xf32>
    %c1 = arith.constant 1 : index
    %c0_2 = arith.constant 0 : index
    %c0_3 = arith.constant 0 : index
    %8 = vector.load %arg2[%c1, %c0_2, %c0_3] : memref<2x4x16xf32, #tpu.memory_space<vmem>>, vector<1x4x16xf32>
    %9 = vector.shape_cast %8 : vector<1x4x16xf32> to vector<4x16xf32>
    %cst_4 = arith.constant 0.000000e+00 : f32
    %10 = vector.broadcast %cst_4 : f32 to vector<4x2xf32>
    %11 = tpu.concatenate %10, %9 in 1 : vector<4x2xf32>, vector<4x16xf32> -> vector<4x18xf32>
    %12 = vector.extract_strided_slice %11 {offsets = [0, 0], sizes = [4, 16], strides = [1, 1]} : vector<4x18xf32> to vector<4x16xf32>
    %13 = vector.extract_strided_slice %11 {offsets = [0, 1], sizes = [4, 16], strides = [1, 1]} : vector<4x18xf32> to vector<4x16xf32>
    %14 = vector.extract_strided_slice %11 {offsets = [0, 2], sizes = [4, 16], strides = [1, 1]} : vector<4x18xf32> to vector<4x16xf32>
    %15 = tpu.concatenate %12, %13, %14 in 0 : vector<4x16xf32>, vector<4x16xf32>, vector<4x16xf32> -> vector<12x16xf32>
    %16 = tpu.concatenate %7, %15 in 1 : vector<12x16xf32>, vector<12x16xf32> -> vector<12x32xf32>
    %c0_5 = arith.constant 0 : index
    %c0_6 = arith.constant 0 : index
    %17 = vector.load %arg3[%c0_5, %c0_6] : memref<8x12xf32, #tpu.memory_space<vmem>>, vector<8x12xf32>
    %cst_7 = arith.constant dense<0.000000e+00> : vector<8x32xf32>
    %18 = tpu.matmul %17, %16, %cst_7 {dimension_numbers = #tpu.dot_dimension_numbers<[1], [0], [0], [1], [0, 0, 1, 1], [], []>} : vector<8x12xf32>, vector<12x32xf32>, vector<8x32xf32> -> vector<8x32xf32>
    %c0_8 = arith.constant 0 : index
    %c0_9 = arith.constant 0 : index
    %19 = vector.load %arg4[%c0_8, %c0_9] : memref<8x1xf32, #tpu.memory_space<vmem>>, vector<8x1xf32>
    %20 = vector.broadcast %19 : vector<8x1xf32> to vector<8x32xf32>
    %21 = arith.addf %18, %20 : vector<8x32xf32>
    %22 = vector.extract_strided_slice %21 {offsets = [0, 0], sizes = [8, 16], strides = [1, 1]} : vector<8x32xf32> to vector<8x16xf32>
    %c0_10 = arith.constant 0 : index
    %c0_11 = arith.constant 0 : index
    %c0_12 = arith.constant 0 : index
    %23 = vector.load %arg5[%c0_10, %c0_11, %c0_12] : memref<2x8x16xf32, #tpu.memory_space<vmem>>, vector<1x8x16xf32>
    %24 = vector.shape_cast %23 : vector<1x8x16xf32> to vector<8x16xf32>
    %25 = vector.shape_cast %22 : vector<8x16xf32> to vector<1x8x16xf32>
    tpu.vector_store %arg5[%c0_10, %c0_11, %c0_12], %25 {strides = array<i32>} : memref<2x8x16xf32, #tpu.memory_space<vmem>>, vector<1x8x16xf32>,
    %26 = vector.extract_strided_slice %21 {offsets = [0, 16], sizes = [8, 16], strides = [1, 1]} : vector<8x32xf32> to vector<8x16xf32>
    %c1_13 = arith.constant 1 : index
    %c0_14 = arith.constant 0 : index
    %c0_15 = arith.constant 0 : index
    %27 = vector.load %arg5[%c1_13, %c0_14, %c0_15] : memref<2x8x16xf32, #tpu.memory_space<vmem>>, vector<1x8x16xf32>
    %28 = vector.shape_cast %27 : vector<1x8x16xf32> to vector<8x16xf32>
    %29 = vector.shape_cast %26 : vector<8x16xf32> to vector<1x8x16xf32>
    tpu.vector_store %arg5[%c1_13, %c0_14, %c0_15], %29 {strides = array<i32>} : memref<2x8x16xf32, #tpu.memory_space<vmem>>, vector<1x8x16xf32>,
    return
  }
  func.func @transform_0(%arg0: i32, %arg1: i32) -> (i32, i32, i32) {
    %c0_i32 = arith.constant 0 : i32
    %c0_i32_0 = arith.constant 0 : i32
    return %arg0, %c0_i32, %arg1 : i32, i32, i32
  }
  func.func @transform_1(%arg0: i32, %arg1: i32) -> (i32, i32) {
    %c0_i32 = arith.constant 0 : i32
    %c0_i32_0 = arith.constant 0 : i32
    %c0_i32_1 = arith.constant 0 : i32
    return %c0_i32, %c0_i32_0 : i32, i32
  }
  func.func @transform_2(%arg0: i32, %arg1: i32) -> (i32, i32) {
    %c0_i32 = arith.constant 0 : i32
    %c0_i32_0 = arith.constant 0 : i32
    %c0_i32_1 = arith.constant 0 : i32
    return %c0_i32, %c0_i32_0 : i32, i32
  }
  func.func @transform_3(%arg0: i32, %arg1: i32) -> (i32, i32, i32) {
    %c0_i32 = arith.constant 0 : i32
    %c0_i32_0 = arith.constant 0 : i32
    return %arg0, %c0_i32, %arg1 : i32, i32, i32
  }
}

</mosaic_0001>

<llo_original>
// kernel: tpu_custom_call.1
$region0: #{tpu_custom_call.1}
  #allocation0 [shape = 'u32[]', space=smem, size = 0x4, offset = 0x4, fixed_abs, tag = 'smem constant byte address 0x4 - core index']
  #allocation1 [shape = 'u32[144,128]{1,0:T(1,128)}', space=vmem, size = 0x12000, scoped, tag = 'internal scratch']
  %s0 = inlined_call_operand.vmem [shape: f32[2,4,16], index: 0, kind: input, shape index: {}]
  %s1 = inlined_call_operand.hbm [shape: f32[8,12], index: 1, kind: input, shape index: {}]
  %s2 = inlined_call_operand.vmem [shape: f32[8,1], index: 2, kind: input, shape index: {}]
  %s3 = inlined_call_operand.hbm [shape: f32[2,8,16], index: 3, kind: output, shape index: {}]
  %s4 = sld [smem:[#allocation0]]
  $region26: #{tpu_custom_call.1} parent=0
    _
  %s6 = ssub.s32 1, %s4
  %s7 = scalar_select 0, %s6, %s4
  $region1: #{tpu_custom_call.1} parent=0
    #allocation2 [shape = 'u8[4096]{0}', space=vmem, size = 0x1000, scoped, tag = 'input window, operand 1, single buffered']
    #allocation3 [shape = 's32[1]{0}', space=sflag, size = 0x4, scoped, tag = 'scoped memory for tpu_custom_call.1']
    #allocation4 [shape = 's32[1]{0}', space=sflag, size = 0x4, scoped, tag = 'scoped memory for tpu_custom_call.1']
    #allocation5 [shape = 'u8[8192]{0}', space=vmem, size = 0x2000, scoped, tag = 'output window, operand 0, single buffered']
    %8 = vsyncpa [#allocation3], 0
    %9 = vsyncpa [#allocation4], 0
    // Predicated region
    $region2: #{tpu_custom_call.1} parent=1 // pred_check
      _
    $region3: #{tpu_custom_call.1} parent=1 // pred_check_branch
      %11 = sbr.rel (0) target = $region5
    $region4: #{tpu_custom_call.1} parent=1 // pred_region
      _
    $region5: #{tpu_custom_call.1} parent=1 // pred_fallthru
      _
    // Predicated region
    $region6: #{tpu_custom_call.1} parent=1 // pred_check
      _
    $region7: #{tpu_custom_call.1} parent=1 // pred_check_branch
      %13 = sbr.rel (0) target = $region9
    $region8: #{tpu_custom_call.1} parent=1 // pred_region
      %s15 = ssub.s32 128, 128
      %16 = vsyncadd [#allocation3], %s15
      %s18 = sshll.u32 [#allocation2], 4
      %s19 = int_to_ptr.vmem [resolvable:$true] %s18
      %21 = dma.hbm_to_vmem [thread:$0]  %s1, 128, %s19, [#allocation3]
    $region9: #{tpu_custom_call.1} parent=1 // pred_fallthru
      _
    // Predicated region
    $region10: #{tpu_custom_call.1} parent=1 // pred_check
      _
    $region11: #{tpu_custom_call.1} parent=1 // pred_check_branch
      %23 = sbr.rel (0) target = $region13
    $region12: #{tpu_custom_call.1} parent=1 // pred_region
      _
    $region13: #{tpu_custom_call.1} parent=1 // pred_fallthru
      _
    // Predicated region
    $region14: #{tpu_custom_call.1} parent=1 // pred_check
      _
    $region15: #{tpu_custom_call.1} parent=1 // pred_check_branch
      %25 = sbr.rel (0) target = $region17
    $region16: #{tpu_custom_call.1} parent=1 // pred_region
      %26 = dma.done [#allocation3], 128
    $region17: #{tpu_custom_call.1} parent=1 // pred_fallthru
      _
    %v27 = vld [vmem:[%s0] sm:$0xf]
    %29 = vrot.lane.b32.xlu0 %v27, 2
    %v30 = vpop.permute.xlu0 %29
    %vm32 = vcmask 15360
    %v33 = vsel %vm32, 0.0, %v30
    %v35 = vrot.slane %v33, 4
    %36 = vrot.lane.b32.xlu0 %v35, 127
    %v37 = vpop.permute.xlu0 %36
    %39 = vrot.lane.b32.xlu0 %v33, 126
    %v40 = vpop.permute.xlu0 %39
    %vm42 = vcmask 1043456
    %v43 = vsel %vm42, %v33, %v37
    %s44 = scalar_lea.vmem %s0, 4
    %v45 = vld [vmem:[%s44] sm:$0xf]
    %47 = vrot.lane.b32.xlu0 %v45, 2
    %v48 = vpop.permute.xlu0 %47
    %v50 = vsel %vm32, 0.0, %v48
    %v52 = vrot.slane %v50, 4
    %53 = vrot.lane.b32.xlu0 %v52, 127
    %v54 = vpop.permute.xlu0 %53
    %56 = vrot.lane.b32.xlu0 %v50, 126
    %v57 = vpop.permute.xlu0 %56
    %v58 = vsel %vm42, %v50, %v54
    %60 = vrot.lane.b32.xlu0 %v58, 16
    %v61 = vpop.permute.xlu0 %60
    %62 = vrot.lane.b32.xlu0 %v57, 16
    %v63 = vpop.permute.xlu0 %62
    %vm66 = vcmask 130048
    %v67 = vsel %vm66, %v43, %v61
    %v68 = vsel %vm66, %v40, %v63
    %v69 = vld [vmem:[#allocation2] sm:$0xff]
    %v70 = vld [vmem:[%s2] sm:$0xff]
    %72 = vset.pattern.permute.xlu0 0
    %73 = vperm.xlu0 %72, %v70
    %v74 = vpop.permute.xlu0 %73
    %vm76 = vcmask 97280
    %v78 = vsel %vm76, %v69, 0
    %v81 = vsel %vm42, %v68, 0
    %83 = vmatprep.subr.mxu0 0.0
    %84 = vmatpush1.msra.mxu0 %v67
    %85 = vmatprep.subr.mxu0 0.0
    %86 = vmatpush1.msra.mxu0 %v81
    %87 = vmatprep.subr.mxu0 0.0
    %88 = vmatpush1.msra.mxu0 0.0
    %89 = vmatprep.subr.mxu0 0.0
    %90 = vmatpush1.msra.mxu0 0.0
    %91 = vmatprep.subr.mxu0 0.0
    %92 = vmatpush1.msra.mxu0 0.0
    %93 = vmatprep.subr.mxu0 0.0
    %94 = vmatpush1.msra.mxu0 0.0
    %95 = vmatprep.subr.mxu0 0.0
    %96 = vmatpush1.msra.mxu0 0.0
    %97 = vmatprep.subr.mxu0 0.0
    %98 = vmatpush1.msra.mxu0 0.0
    %99 = vmatprep.subr.mxu0 0.0
    %100 = vmatpush1.msra.mxu0 0.0
    %101 = vmatprep.subr.mxu0 0.0
    %102 = vmatpush1.msra.mxu0 0.0
    %103 = vmatprep.subr.mxu0 0.0
    %104 = vmatpush1.msra.mxu0 0.0
    %105 = vmatprep.subr.mxu0 0.0
    %106 = vmatpush1.msra.mxu0 0.0
    %107 = vmatprep.subr.mxu0 0.0
    %108 = vmatpush1.msra.mxu0 0.0
    %109 = vmatprep.subr.mxu0 0.0
    %110 = vmatpush1.msra.mxu0 0.0
    %111 = vmatprep.subr.mxu0 0.0
    %112 = vmatpush1.msra.mxu0 0.0
    %113 = vmatprep.subr.mxu0 0.0
    %114 = vmatpush1.msra.mxu0 0.0
    %115 = vmatprep.subr.mxu0 0.0
    %116 = vmatpush1.msra.mxu0 0.0
    %117 = vmatprep.subr.mxu0 0.0
    %118 = vmatpush1.msra.mxu0 0.0
    %119 = vmatprep.subr.mxu0 0.0
    %120 = vmatpush1.msra.mxu0 0.0
    %121 = vmatprep.subr.mxu0 0.0
    %122 = vmatpush1.msra.mxu0 0.0
    %123 = vmatprep.subr.mxu0 0.0
    %124 = vmatpush1.msra.mxu0 0.0
    %125 = vmatprep.subr.mxu0 0.0
    %126 = vmatpush1.msra.mxu0 0.0
    %127 = vmatprep.subr.mxu0 0.0
    %128 = vmatpush1.msra.mxu0 0.0
    %129 = vmatprep.subr.mxu0 0.0
    %130 = vmatpush1.msra.mxu0 0.0
    %131 = vmatprep.subr.mxu0 0.0
    %132 = vmatpush1.msra.mxu0 0.0
    %133 = vmatprep.subr.mxu0 0.0
    %134 = vmatpush1.msra.mxu0 0.0
    %135 = vmatprep.subr.mxu0 0.0
    %136 = vmatpush1.msra.mxu0 0.0
    %137 = vmatprep.subr.mxu0 0.0
    %138 = vmatpush1.msra.mxu0 0.0
    %139 = vmatprep.subr.mxu0 0.0
    %140 = vmatpush1.msra.mxu0 0.0
    %141 = vmatprep.subr.mxu0 0.0
    %142 = vmatpush1.msra.mxu0 0.0
    %143 = vmatprep.subr.mxu0 0.0
    %144 = vmatpush1.msra.mxu0 0.0
    %145 = vmatprep.subr.mxu0 0.0
    %146 = vmatpush1.msra.mxu0 0.0
    %147 = vmatprep.mubr.f32.mxu0 0.0
    %148 = vmatmul.mubr.f32.gmra.mrb[0].mxu0 %v78
    %v149 = vpop.f32.mrb[0].mxu0
    %v150 = vadd.f32 %v74, %v149
    %v151 = vpop.f32.mrb[0].mxu0
    %152 = vdwg.mxu0
    %153 = vst.msk [vmem:[#allocation5] sm:$0xff] %vm66, %v150
    %155 = vrot.lane.b32.xlu0 %v150, 112
    %v156 = vpop.permute.xlu0 %155
    %s158 = scalar_lea.vmem [#allocation5], 8
    %159 = vst.msk [vmem:[%s158] sm:$0xff] %vm66, %v156
    // Predicated region
    $region18: #{tpu_custom_call.1} parent=1 // pred_check
      _
    $region19: #{tpu_custom_call.1} parent=1 // pred_check_branch
      %161 = sbr.rel (0) target = $region21
    $region20: #{tpu_custom_call.1} parent=1 // pred_region
      %s163 = ssub.s32 256, 256
      %164 = vsyncadd [#allocation4], %s163
      %s165 = sshll.u32 [#allocation5], 4
      %s166 = int_to_ptr.vmem [resolvable:$true] %s165
      %171 = dma.vmem_to_hbm [thread:$0]  %s166, 256, %s3, [#allocation4], 128, 128, 8
    $region21: #{tpu_custom_call.1} parent=1 // pred_fallthru
      _
    // Predicated region
    $region22: #{tpu_custom_call.1} parent=1 // pred_check
      _
    $region23: #{tpu_custom_call.1} parent=1 // pred_check_branch
      %173 = sbr.rel (0) target = $region25
    $region24: #{tpu_custom_call.1} parent=1 // pred_region
      %174 = dma.done [#allocation4], 256
    $region25: #{tpu_custom_call.1} parent=1 // pred_fallthru
      _
    %175 = vsyncpa [#allocation3], 1
    %176 = vsyncpa [#allocation4], 1

</llo_original>
